<compile_context>
chip_gen: v5e
topology: v5e:2x2
jax: 0.10.0
libtpu: 0.0.40
codegen_flags: <defaults>
</compile_context>

<pallas_src>
import jax
import jax.numpy as jnp
from jax.experimental import pallas as pl
from jax.experimental.pallas import tpu as pltpu

IN_FEATURES = 10
OUT_FEATURES = 1

_LANES = 128                      # batch rows folded per lane-dense group row
_PACKED = _LANES * IN_FEATURES    # 1280 f32 per group row
_SMALL_BATCH = 1024               # below this, plain XLA beats a pallas_call

# Per-group-row VMEM cost: double-buffered x tile + double-buffered out tile.
_ROW_BYTES = 2 * _PACKED * 4 + 2 * _LANES * 4           # 11264 B / group row
_WBIG_BYTES = 2 * _PACKED * _LANES * 4                   # weight (budget 2 buffers)
_HEADROOM = 2 << 20


def classifier_kernel(x_ref, wbig_ref, b_ref, o_ref):
    # x_ref:    (R, 1280) VMEM lane-dense packed batch tile
    #           (row g, lane 10*b+f  ==  x[g*128 + b, f])
    # wbig_ref: (1280, 128) VMEM expanded weight (same block every step -> resident)
    # b_ref:    (1,) SMEM scalar bias (no VMEM stream for one float)
    # o_ref:    (R, 128) VMEM lane-dense probs (row g, lane b == batch row g*128+b)
    logits = jnp.dot(x_ref[...], wbig_ref[...], preferred_element_type=jnp.float32)
    o_ref[...] = jax.nn.sigmoid(logits + b_ref[0]).astype(o_ref.dtype)  # EUP exp/div


def _vmem_capacity_bytes():
    # Generation-aware VMEM capacity (v5e/v6e: 128 MiB, v7x: 64 MiB per TC).
    try:
        return int(pltpu.get_tpu_info().vmem_capacity_bytes)
    except Exception:
        return 64 << 20  # conservative default (v7x per-TC VMEM)


def classifier_forward(x, weight, bias):
    """sigmoid(x @ weight.T + bias).  x: (B, 10) f32 -> (B, 1) f32."""
    B, IN = x.shape
    assert IN == IN_FEATURES and weight.shape == (OUT_FEATURES, IN_FEATURES)
    assert bias.shape == (OUT_FEATURES,)

    if B < _SMALL_BATCH:
        # Small-batch fallback: one fused XLA GEMV + sigmoid is faster than a
        # single pallas_call dispatch + one grid step.
        return jax.nn.sigmoid(x @ weight.T + bias)

    groups = pl.cdiv(B, _LANES)                       # lane-dense group rows

    # ---- tile size: as large as VMEM allows, but keep >= 2 tiles for megacore ----
    vmem_cap = _vmem_capacity_bytes()
    budget = min(int(0.70 * vmem_cap), 100 << 20)
    r_cap = (budget - _WBIG_BYTES - _HEADROOM) // _ROW_BYTES
    r_cap = max(8, min(4096, (r_cap // 8) * 8))       # 4096 grp rows = 512K batch rows
    min_tiles = 2 if groups >= 16 else 1              # split across both v7x TCs
    r = min(r_cap, pl.cdiv(groups, min_tiles))
    num_tiles = max(min_tiles, pl.cdiv(groups, r))
    r = 8 * pl.cdiv(pl.cdiv(groups, num_tiles), 8)    # rebalance + sublane align
    num_tiles = pl.cdiv(groups, r)
    g_pad = num_tiles * r
    b_pad = g_pad * _LANES

    # ---- lane-dense repack: (B,10) -> pad -> (g_pad, 1280), contiguous reshape ----
    x_pad = jnp.pad(x, ((0, b_pad - B), (0, 0))) if b_pad != B else x
    x2 = x_pad.reshape(g_pad, _PACKED)

    # ---- expanded weight: W_big[10*b + f, b] = w[f]  (640 KiB, VMEM-resident) ----
    w_row = weight.reshape(IN_FEATURES).astype(jnp.float32)
    eye = jnp.eye(_LANES, dtype=jnp.float32)                        # (128, 128)
    w_big = (eye[:, None, :] * w_row[None, :, None]).reshape(_PACKED, _LANES)

    vmem_limit = int(min(_WBIG_BYTES + _ROW_BYTES * r + _HEADROOM, vmem_cap))

    cost = pl.CostEstimate(
        flops=2 * g_pad * _PACKED * _LANES,
        transcendentals=b_pad,
        bytes_accessed=4 * (g_pad * _PACKED + _PACKED * _LANES + 1 + g_pad * _LANES),
    )

    out = pl.pallas_call(
        classifier_kernel,
        out_shape=jax.ShapeDtypeStruct((g_pad, _LANES), jnp.float32),
        grid=(num_tiles,),
        in_specs=[
            # Contiguous lane-dense batch tile; double-buffered over the grid.
            pl.BlockSpec((r, _PACKED), lambda i: (i, 0)),
            # Expanded weight: identical block every step -> stays in VMEM.
            pl.BlockSpec((_PACKED, _LANES), lambda i: (0, 0)),
            # Scalar bias in SMEM.
            pl.BlockSpec(memory_space=pltpu.MemorySpace.SMEM),
        ],
        # Lane-dense output tile: batch on lanes -> unmasked stores.
        out_specs=pl.BlockSpec((r, _LANES), lambda i: (i, 0)),
        compiler_params=pltpu.CompilerParams(
            dimension_semantics=("parallel",),   # independent tiles -> both v7x TCs
            vmem_limit_bytes=vmem_limit,         # make the large tile legal
        ),
        cost_estimate=cost,
    )(x2, w_big, bias.astype(jnp.float32))

    # (g_pad, 128) lane-dense -> (b_pad,) -> slice padded rows -> (B, 1).
    return out.reshape(b_pad)[:B].reshape(B, OUT_FEATURES)


def init_params(key):
    # nn.Linear(10, 1) with xavier_uniform_ weight and zero bias.
    fan_in, fan_out = IN_FEATURES, OUT_FEATURES
    bound = (6.0 / (fan_in + fan_out)) ** 0.5
    weight = jax.random.uniform(
        key, (fan_out, fan_in), dtype=jnp.float32, minval=-bound, maxval=bound
    )
    bias = jnp.zeros((fan_out,), dtype=jnp.float32)
    return weight, bias


if __name__ == "__main__":
    key = jax.random.PRNGKey(0)
    k_w, k_x1, k_x2 = jax.random.split(key, 3)
    weight, bias = init_params(k_w)

    # Tolerance note: the MXU f32 matmul and XLA's default-precision reference
    # GEMV may round slightly differently; 2e-3 still catches any real
    # indexing/packing bug (which would be O(0.1-1)).
    TOL = 2e-3

    # --- Pallas path: batch big enough for 2 tiles + row padding (2000 -> 2048).
    xb = jax.random.normal(k_x1, (2000, IN_FEATURES), dtype=jnp.float32)
    outb = jax.block_until_ready(classifier_forward(xb, weight, bias))
    refb = jax.nn.sigmoid(xb @ weight.T + bias)
    assert outb.shape == (2000, 1)
    assert jnp.allclose(outb, refb, atol=TOL, rtol=TOL)

    # --- Same shapes, non-zero bias: exercises the SMEM scalar broadcast add.
    bias2 = jnp.full((OUT_FEATURES,), 0.3, dtype=jnp.float32)
    outb2 = jax.block_until_ready(classifier_forward(xb, weight, bias2))
    refb2 = jax.nn.sigmoid(xb @ weight.T + bias2)
    assert jnp.allclose(outb2, refb2, atol=TOL, rtol=TOL)

    # --- Tiny batch: small-batch fallback path (pure XLA).
    xs = jax.random.normal(k_x2, (8, IN_FEATURES), dtype=jnp.float32)
    outs = jax.block_until_ready(classifier_forward(xs, weight, bias))
    refs = jax.nn.sigmoid(xs @ weight.T + bias)
    assert outs.shape == (8, 1)
    assert jnp.allclose(outs, refs, atol=1e-5, rtol=1e-5)

    print("KERNEL_OK")
</pallas_src>

<mosaic_0001>
module attributes {stable_mosaic.version = 11 : i64} {
  func.func @classifier_kernel(%arg0: i32, %arg1: memref<8x1280xf32, #tpu.memory_space<vmem>>, %arg2: memref<1280x128xf32, #tpu.memory_space<vmem>>, %arg3: memref<1xf32, #tpu.memory_space<smem>>, %arg4: memref<8x128xf32, #tpu.memory_space<vmem>>) attributes {dimension_semantics = [#tpu.dimension_semantics<parallel>], iteration_bounds = array<i64: 2>, scalar_prefetch = 0 : i64, scratch_operands = 0 : i64, tpu.core_type = #tpu.core_type<tc>, window_params = [{transform_indices = @transform_0, window_bounds = array<i64: 8, 1280>}, {pipeline_mode = #tpu.pipeline_mode<synchronous>, transform_indices = @transform_1, window_bounds = array<i64: 1280, 128>}, {transform_indices = @transform_2, window_bounds = array<i64: 1>}, {transform_indices = @transform_3, window_bounds = array<i64: 8, 128>}]} {
    %c0 = arith.constant 0 : index
    %c0_0 = arith.constant 0 : index
    %0 = vector.load %arg1[%c0, %c0_0] : memref<8x1280xf32, #tpu.memory_space<vmem>>, vector<8x1280xf32>
    %c0_1 = arith.constant 0 : index
    %c0_2 = arith.constant 0 : index
    %1 = vector.load %arg2[%c0_1, %c0_2] : memref<1280x128xf32, #tpu.memory_space<vmem>>, vector<1280x128xf32>
    %cst = arith.constant dense<0.000000e+00> : vector<8x128xf32>
    %2 = tpu.matmul %0, %1, %cst {dimension_numbers = #tpu.dot_dimension_numbers<[1], [0], [0], [1], [0, 0, 1, 1], [], []>} : vector<8x1280xf32>, vector<1280x128xf32>, vector<8x128xf32> -> vector<8x128xf32>
    %c0_3 = arith.constant 0 : index
    %3 = memref.load %arg3[%c0_3] : memref<1xf32, #tpu.memory_space<smem>>
    %4 = vector.broadcast %3 : f32 to vector<8x128xf32>
    %5 = arith.addf %2, %4 : vector<8x128xf32>
    %6 = arith.negf %5 : vector<8x128xf32>
    %7 = math.exp %6 : vector<8x128xf32>
    %cst_4 = arith.constant 1.000000e+00 : f32
    %8 = vector.broadcast %cst_4 : f32 to vector<8x128xf32>
    %9 = arith.addf %8, %7 : vector<8x128xf32>
    %10 = arith.divf %8, %9 : vector<8x128xf32>
    %c0_5 = arith.constant 0 : index
    %c0_6 = arith.constant 0 : index
    %11 = vector.load %arg4[%c0_5, %c0_6] : memref<8x128xf32, #tpu.memory_space<vmem>>, vector<8x128xf32>
    tpu.vector_store %arg4[%c0_5, %c0_6], %10 {strides = array<i32>} : memref<8x128xf32, #tpu.memory_space<vmem>>, vector<8x128xf32>,
    return
  }
  func.func @transform_0(%arg0: i32) -> (i32, i32) {
    %c0_i32 = arith.constant 0 : i32
    %c0_i32_0 = arith.constant 0 : i32
    return %arg0, %c0_i32 : i32, i32
  }
  func.func @transform_1(%arg0: i32) -> (i32, i32) {
    %c0_i32 = arith.constant 0 : i32
    %c0_i32_0 = arith.constant 0 : i32
    %c0_i32_1 = arith.constant 0 : i32
    return %c0_i32, %c0_i32_0 : i32, i32
  }
  func.func @transform_2(%arg0: i32) -> i32 {
    %c0_i32 = arith.constant 0 : i32
    %c0_i32_0 = arith.constant 0 : i32
    return %c0_i32 : i32
  }
  func.func @transform_3(%arg0: i32) -> (i32, i32) {
    %c0_i32 = arith.constant 0 : i32
    %c0_i32_0 = arith.constant 0 : i32
    return %arg0, %c0_i32 : i32, i32
  }
}

</mosaic_0001>

<llo_original>
// kernel: tpu_custom_call.1
$region0: #{tpu_custom_call.1}
  #allocation0 [shape = 'u32[]', space=smem, size = 0x4, offset = 0x4, fixed_abs, tag = 'smem constant byte address 0x4 - core index']
  #allocation1 [shape = 'u32[72,128]{1,0:T(1,128)}', space=vmem, size = 0x9000, scoped, tag = 'internal scratch']
  #allocation2 [shape = 'f32[1]{0:T(128)S(6)}', space=smem, size = 0x200, scoped, tag = 'scoped memory for tpu_custom_call.1']
  %s0 = inlined_call_operand.hbm [shape: f32[16,1280], index: 0, kind: input, shape index: {}]
  %s1 = inlined_call_operand.hbm [shape: f32[1280,128], index: 1, kind: input, shape index: {}]
  %s2 = inlined_call_operand.<no memory space> [shape: f32[1], index: 2, kind: input, shape index: {}]
  %s3 = inlined_call_operand.hbm [shape: f32[16,128], index: 3, kind: output, shape index: {}]
  %s4 = sld [smem:[#allocation0]]
  $region53: #{tpu_custom_call.1} parent=0
    _
  %s6 = ssub.s32 1, %s4
  %s7 = scalar_select 0, %s6, %s4
  %8 = sst [smem:[#allocation2]] %s2
  $region1: #{tpu_custom_call.1} parent=0
    #allocation3 [shape = 'u8[81920]{0}', space=vmem, size = 0x14000, scoped, tag = 'input window, operand 0']
    #allocation4 [shape = 's32[2]{0}', space=sflag, size = 0x8, scoped, tag = 'scoped memory for tpu_custom_call.1']
    #allocation5 [shape = 's32[2]{0}', space=sflag, size = 0x8, scoped, tag = 'scoped memory for tpu_custom_call.1']
    #allocation6 [shape = 'u8[655360]{0}', space=vmem, size = 0xa0000, scoped, tag = 'input window, operand 1, single buffered']
    #allocation7 [shape = 's32[1]{0}', space=sflag, size = 0x4, scoped, tag = 'scoped memory for tpu_custom_call.1']
    #allocation8 [shape = 'u8[8192]{0}', space=vmem, size = 0x2000, scoped, tag = 'output window, operand 0']
    %9 = vsyncpa [#allocation4], 0
    %s10 = scalar_lea.sflag [#allocation4], 1
    %11 = vsyncpa %s10, 0
    %12 = vsyncpa [#allocation7], 0
    %13 = vsyncpa [#allocation5], 0
    %s14 = scalar_lea.sflag [#allocation5], 1
    %15 = vsyncpa %s14, 0
    loop: start=0, step=1, limit=4
    $region2: #{tpu_custom_call.1} parent=1 // loop_pre_header
      _
    $region3: #{tpu_custom_call.1} parent=1 // loop_header
      %s17 = sphi 0, %s21
      %p18 = scmp.ge.s32.totalorder %s17, 4
      %s27 = sphi 0, %s29
      %s30 = sphi 0, %s27
      %s31 = sphi 0, %s30
      %s47 = sphi 0, %s31
      %s51 = sphi 0, %s51
      %s53 = sphi 0, %s51
      %s54 = sphi 0, %s53
      %s68 = sphi 0, %s54
      %s72 = sphi 0, %s72
      %s74 = sphi 0, %s72
      %s75 = sphi 0, %s74
      %s89 = sphi 0, %s75
      %s95 = sphi 0, %s97
      %s98 = sphi 0, %s95
      %s99 = sphi 0, %s98
      %s115 = sphi 0, %s99
    $region4: #{tpu_custom_call.1} parent=1 // loop_header_branch
      %20 = sbr.rel (%p18) target = $region8
    $region5: #{tpu_custom_call.1} parent=1 // loop_body
      %s22 = ssub.s32 %s17, 1
      %s23 = ssub.s32 %s17, 2
      %s24 = sadd.s32 %s17, 1
      %s25 = ssub.s32 %s17, %s24
      %p26 = scmp.eq.s32.totalorder %s25, 0
      %s28 = sadd.s32 %s27, 1
      %s29 = scalar_select %p26, %s27, %s28
      %p32 = pneg %p26
      %p33 = scmp.eq.s32.totalorder %s17, 1
      %p34 = por %p32, %p33
      %p35 = scmp.ne.s32.totalorder %s27, %s30
      %p36 = scmp.eq.s32.totalorder %s17, 0
      %p37 = por %p35, %p36
      %p38 = scmp.ne.s32.totalorder %s27, %s30
      %p39 = scmp.eq.s32.totalorder %s22, 1
      %p40 = por %p38, %p39
      %p41 = scmp.ne.s32.totalorder %s30, %s31
      %p42 = scmp.eq.s32.totalorder %s22, 0
      %p43 = por %p41, %p42
      %p44 = scmp.ne.s32.totalorder %s30, %s31
      %p45 = scmp.eq.s32.totalorder %s23, 1
      %p46 = por %p44, %p45
      %p48 = scmp.ne.s32.totalorder %s31, %s47
      %p49 = scmp.eq.s32.totalorder %s23, 0
      %p50 = por %p48, %p49
      %s52 = sadd.s32 %s51, 1
      %p55 = scmp.eq.s32.totalorder %s17, 1
      %p56 = scmp.ne.s32.totalorder %s51, %s53
      %p57 = scmp.eq.s32.totalorder %s17, 0
      %p58 = por %p56, %p57
      %p59 = scmp.ne.s32.totalorder %s51, %s53
      %p60 = scmp.eq.s32.totalorder %s22, 1
      %p61 = por %p59, %p60
      %p62 = scmp.ne.s32.totalorder %s53, %s54
      %p63 = scmp.eq.s32.totalorder %s22, 0
      %p64 = por %p62, %p63
      %p65 = scmp.ne.s32.totalorder %s53, %s54
      %p66 = scmp.eq.s32.totalorder %s23, 1
      %p67 = por %p65, %p66
      %p69 = scmp.ne.s32.totalorder %s54, %s68
      %p70 = scmp.eq.s32.totalorder %s23, 0
      %p71 = por %p69, %p70
      %s73 = sadd.s32 %s72, 1
      %p76 = scmp.eq.s32.totalorder %s17, 1
      %p77 = scmp.ne.s32.totalorder %s72, %s74
      %p78 = scmp.eq.s32.totalorder %s17, 0
      %p79 = por %p77, %p78
      %p80 = scmp.ne.s32.totalorder %s72, %s74
      %p81 = scmp.eq.s32.totalorder %s22, 1
      %p82 = por %p80, %p81
      %p83 = scmp.ne.s32.totalorder %s74, %s75
      %p84 = scmp.eq.s32.totalorder %s22, 0
      %p85 = por %p83, %p84
      %p86 = scmp.ne.s32.totalorder %s74, %s75
      %p87 = scmp.eq.s32.totalorder %s23, 1
      %p88 = por %p86, %p87
      %p90 = scmp.ne.s32.totalorder %s75, %s89
      %p91 = scmp.eq.s32.totalorder %s23, 0
      %p92 = por %p90, %p91
      %s93 = ssub.s32 %s17, %s24
      %p94 = scmp.eq.s32.totalorder %s93, 0
      %s96 = sadd.s32 %s95, 1
      %s97 = scalar_select %p94, %s95, %s96
      %p100 = pneg %p94
      %p101 = scmp.eq.s32.totalorder %s17, 1
      %p102 = por %p100, %p101
      %p103 = scmp.ne.s32.totalorder %s95, %s98
      %p104 = scmp.eq.s32.totalorder %s17, 0
      %p105 = por %p103, %p104
      %p106 = scmp.ne.s32.totalorder %s95, %s98
      %p107 = scmp.eq.s32.totalorder %s22, 1
      %p108 = por %p106, %p107
      %p109 = scmp.ne.s32.totalorder %s98, %s99
      %p110 = scmp.eq.s32.totalorder %s22, 0
      %p111 = por %p109, %p110
      %p112 = scmp.ne.s32.totalorder %s98, %s99
      %p113 = scmp.eq.s32.totalorder %s23, 1
      %p114 = por %p112, %p113
      %p116 = scmp.ne.s32.totalorder %s99, %s115
      %p117 = scmp.eq.s32.totalorder %s23, 0
      %p118 = por %p116, %p117
      %p119 = scmp.le.s32.totalorder 1, %s17
      %p120 = scmp.lt.s32.totalorder %s17, 3
      %p121 = pnand %p119, %p120
      %p122 = pneg %p121
      // Predicated region
      $region9: #{tpu_custom_call.1} parent=5 // pred_check
        _
      $region10: #{tpu_custom_call.1} parent=5 // pred_check_branch
        %124 = sbr.rel (%p121) target = $region12
      $region11: #{tpu_custom_call.1} parent=5 // pred_region
        %s125 = ssub.s32 %s17, 1
        // Predicated region
        $region13: #{tpu_custom_call.1} parent=11 // pred_check
          %p126 = pneg %p64
        $region14: #{tpu_custom_call.1} parent=11 // pred_check_branch
          %128 = sbr.rel (%p126) target = $region16
        $region15: #{tpu_custom_call.1} parent=11 // pred_region
          %130 = vsyncadd [#allocation7], 0
          %s131 = sshll.u32 %s1, 4
          %s132 = int_to_ptr.hbm [resolvable:$true] %s131
          %s133 = sshll.u32 [#allocation6], 4
          %s134 = int_to_ptr.vmem [resolvable:$true] %s133
          %139 = dma.hbm_to_vmem [thread:$0]  %s132, 20480, %s134, [#allocation7], 128, 128, 8
        $region16: #{tpu_custom_call.1} parent=11 // pred_fallthru
          _
        // Predicated region
        $region17: #{tpu_custom_call.1} parent=11 // pred_check
          %p140 = pneg %p85
        $region18: #{tpu_custom_call.1} parent=11 // pred_check_branch
          %142 = sbr.rel (%p140) target = $region20
        $region19: #{tpu_custom_call.1} parent=11 // pred_region
          _
        $region20: #{tpu_custom_call.1} parent=11 // pred_fallthru
          _
      $region12: #{tpu_custom_call.1} parent=5 // pred_fallthru
        _
      %p143 = scmp.lt.s32.totalorder %s17, 2
      // Predicated region
      $region21: #{tpu_custom_call.1} parent=5 // pred_check
        %p144 = pneg %p143
      $region22: #{tpu_custom_call.1} parent=5 // pred_check_branch
        %146 = sbr.rel (%p144) target = $region24
      $region23: #{tpu_custom_call.1} parent=5 // pred_region
        // Predicated region
        $region25: #{tpu_custom_call.1} parent=23 // pred_check
          %p147 = pneg %p37
        $region26: #{tpu_custom_call.1} parent=23 // pred_check_branch
          %149 = sbr.rel (%p147) target = $region28
        $region27: #{tpu_custom_call.1} parent=23 // pred_region
          %s150 = sand.u32 %s27, 1
          %s151 = scalar_lea.sflag [#allocation4], %s150
          %s152 = sand.u32 %s27, 1
          %s153 = smul.addr %s152, 80
          %s154 = scalar_lea.vmem [#allocation3], %s153
          %156 = vsyncadd %s151, 0
          %s157 = smul.addr %s17, 10
          %s158 = smul.addr %s157, 8
          %s159 = scalar_lea.hbm %s0, %s158
          %s161 = sshll.u32 %s159, 4
          %s162 = int_to_ptr.hbm [resolvable:$true] %s161
          %s163 = sshll.u32 %s154, 4
          %s164 = int_to_ptr.vmem [resolvable:$true] %s163
          %166 = dma.hbm_to_vmem [thread:$0]  %s162, 1280, %s164, %s151
        $region28: #{tpu_custom_call.1} parent=23 // pred_fallthru
          _
      $region24: #{tpu_custom_call.1} parent=5 // pred_fallthru
        _
      %p167 = scmp.le.s32.totalorder 1, %s17
      %p168 = scmp.lt.s32.totalorder %s17, 3
      %p169 = pnand %p167, %p168
      %p170 = pneg %p169
      // Predicated region
      $region29: #{tpu_custom_call.1} parent=5 // pred_check
        _
      $region30: #{tpu_custom_call.1} parent=5 // pred_check_branch
        %172 = sbr.rel (%p169) target = $region32
      $region31: #{tpu_custom_call.1} parent=5 // pred_region
        %s173 = ssub.s32 %s17, 1
        %s174 = sand.u32 %s30, 1
        %s175 = scalar_lea.sflag [#allocation4], %s174
        %s176 = sand.u32 %s30, 1
        %s177 = smul.addr %s176, 80
        %s178 = scalar_lea.vmem [#allocation3], %s177
        // Predicated region
        $region33: #{tpu_custom_call.1} parent=31 // pred_check
          %p179 = pneg %p43
        $region34: #{tpu_custom_call.1} parent=31 // pred_check_branch
          %181 = sbr.rel (%p179) target = $region36
        $region35: #{tpu_custom_call.1} parent=31 // pred_region
          %183 = dma.done %s175, 1280
        $region36: #{tpu_custom_call.1} parent=31 // pred_fallthru
          _
        // Predicated region
        $region37: #{tpu_custom_call.1} parent=31 // pred_check
          %p184 = pneg %p64
        $region38: #{tpu_custom_call.1} parent=31 // pred_check_branch
          %186 = sbr.rel (%p184) target = $region40
        $region39: #{tpu_custom_call.1} parent=31 // pred_region
          %188 = dma.done [#allocation7], 20480
        $region40: #{tpu_custom_call.1} parent=31 // pred_fallthru
          _
        %s189 = sand.u32 %s30, 1
        %s190 = scalar_lea.sflag [#allocation4], %s189
        %s191 = sand.u32 %s30, 1
        %s192 = smul.addr %s191, 80
        %s193 = scalar_lea.vmem [#allocation3], %s192
        %p194 = pneg %p43
        %p195 = pneg %p40
        %p196 = pneg %p64
        %p197 = pneg %p61
        %p198 = pneg %p85
        %p199 = pneg %p82
        %p200 = pneg %p111
        %p201 = pneg %p108
        %s202 = sand.u32 %s98, 1
        %s203 = scalar_lea.sflag [#allocation5], %s202
        %s204 = sand.u32 %s98, 1
        %s205 = smul.addr %s204, 8
        %s206 = scalar_lea.vmem [#allocation8], %s205
        %v207 = vld [vmem:[%s178] sm:$0xff]
        %v208 = vld [vmem:[%s178 + $0x8] sm:$0xff]
        %v209 = vld [vmem:[%s178 + $0x10] sm:$0xff]
        %v210 = vld [vmem:[%s178 + $0x18] sm:$0xff]
        %v211 = vld [vmem:[%s178 + $0x20] sm:$0xff]
        %v212 = vld [vmem:[%s178 + $0x28] sm:$0xff]
        %v213 = vld [vmem:[%s178 + $0x30] sm:$0xff]
        %v214 = vld [vmem:[%s178 + $0x38] sm:$0xff]
        %v215 = vld [vmem:[%s178 + $0x40] sm:$0xff]
        %v216 = vld [vmem:[%s178 + $0x48] sm:$0xff]
        %v217 = vld [vmem:[#allocation6] sm:$0xff]
        %v218 = vld [vmem:[#allocation6 + $0x8] sm:$0xff]
        %v219 = vld [vmem:[#allocation6 + $0x10] sm:$0xff]
        %v220 = vld [vmem:[#allocation6 + $0x18] sm:$0xff]
        %v221 = vld [vmem:[#allocation6 + $0x20] sm:$0xff]
        %v222 = vld [vmem:[#allocation6 + $0x28] sm:$0xff]
        %v223 = vld [vmem:[#allocation6 + $0x30] sm:$0xff]
        %v224 = vld [vmem:[#allocation6 + $0x38] sm:$0xff]
        %v225 = vld [vmem:[#allocation6 + $0x40] sm:$0xff]
        %v226 = vld [vmem:[#allocation6 + $0x48] sm:$0xff]
        %v227 = vld [vmem:[#allocation6 + $0x50] sm:$0xff]
        %v228 = vld [vmem:[#allocation6 + $0x58] sm:$0xff]
        %v229 = vld [vmem:[#allocation6 + $0x60] sm:$0xff]
        %v230 = vld [vmem:[#allocation6 + $0x68] sm:$0xff]
        %v231 = vld [vmem:[#allocation6 + $0x70] sm:$0xff]
        %v232 = vld [vmem:[#allocation6 + $0x78] sm:$0xff]
        %v233 = vld [vmem:[#allocation6 + $0x80] sm:$0xff]
        %v234 = vld [vmem:[#allocation6 + $0x88] sm:$0xff]
        %v235 = vld [vmem:[#allocation6 + $0x90] sm:$0xff]
        %v236 = vld [vmem:[#allocation6 + $0x98] sm:$0xff]
        %v237 = vld [vmem:[#allocation6 + $0xa0] sm:$0xff]
        %v238 = vld [vmem:[#allocation6 + $0xa8] sm:$0xff]
        %v239 = vld [vmem:[#allocation6 + $0xb0] sm:$0xff]
        %v240 = vld [vmem:[#allocation6 + $0xb8] sm:$0xff]
        %v241 = vld [vmem:[#allocation6 + $0xc0] sm:$0xff]
        %v242 = vld [vmem:[#allocation6 + $0xc8] sm:$0xff]
        %v243 = vld [vmem:[#allocation6 + $0xd0] sm:$0xff]
        %v244 = vld [vmem:[#allocation6 + $0xd8] sm:$0xff]
        %v245 = vld [vmem:[#allocation6 + $0xe0] sm:$0xff]
        %v246 = vld [vmem:[#allocation6 + $0xe8] sm:$0xff]
        %v247 = vld [vmem:[#allocation6 + $0xf0] sm:$0xff]
        %v248 = vld [vmem:[#allocation6 + $0xf8] sm:$0xff]
        %v249 = vld [vmem:[#allocation6 + $0x100] sm:$0xff]
        %v250 = vld [vmem:[#allocation6 + $0x108] sm:$0xff]
        %v251 = vld [vmem:[#allocation6 + $0x110] sm:$0xff]
        %v252 = vld [vmem:[#allocation6 + $0x118] sm:$0xff]
        %v253 = vld [vmem:[#allocation6 + $0x120] sm:$0xff]
        %v254 = vld [vmem:[#allocation6 + $0x128] sm:$0xff]
        %v255 = vld [vmem:[#allocation6 + $0x130] sm:$0xff]
        %v256 = vld [vmem:[#allocation6 + $0x138] sm:$0xff]
        %v257 = vld [vmem:[#allocation6 + $0x140] sm:$0xff]
        %v258 = vld [vmem:[#allocation6 + $0x148] sm:$0xff]
        %v259 = vld [vmem:[#allocation6 + $0x150] sm:$0xff]
        %v260 = vld [vmem:[#allocation6 + $0x158] sm:$0xff]
        %v261 = vld [vmem:[#allocation6 + $0x160] sm:$0xff]
        %v262 = vld [vmem:[#allocation6 + $0x168] sm:$0xff]
        %v263 = vld [vmem:[#allocation6 + $0x170] sm:$0xff]
        %v264 = vld [vmem:[#allocation6 + $0x178] sm:$0xff]
        %v265 = vld [vmem:[#allocation6 + $0x180] sm:$0xff]
        %v266 = vld [vmem:[#allocation6 + $0x188] sm:$0xff]
        %v267 = vld [vmem:[#allocation6 + $0x190] sm:$0xff]
        %v268 = vld [vmem:[#allocation6 + $0x198] sm:$0xff]
        %v269 = vld [vmem:[#allocation6 + $0x1a0] sm:$0xff]
        %v270 = vld [vmem:[#allocation6 + $0x1a8] sm:$0xff]
        %v271 = vld [vmem:[#allocation6 + $0x1b0] sm:$0xff]
        %v272 = vld [vmem:[#allocation6 + $0x1b8] sm:$0xff]
        %v273 = vld [vmem:[#allocation6 + $0x1c0] sm:$0xff]
        %v274 = vld [vmem:[#allocation6 + $0x1c8] sm:$0xff]
        %v275 = vld [vmem:[#allocation6 + $0x1d0] sm:$0xff]
        %v276 = vld [vmem:[#allocation6 + $0x1d8] sm:$0xff]
        %v277 = vld [vmem:[#allocation6 + $0x1e0] sm:$0xff]
        %v278 = vld [vmem:[#allocation6 + $0x1e8] sm:$0xff]
        %v279 = vld [vmem:[#allocation6 + $0x1f0] sm:$0xff]
        %v280 = vld [vmem:[#allocation6 + $0x1f8] sm:$0xff]
        %v281 = vld [vmem:[#allocation6 + $0x200] sm:$0xff]
        %v282 = vld [vmem:[#allocation6 + $0x208] sm:$0xff]
        %v283 = vld [vmem:[#allocation6 + $0x210] sm:$0xff]
        %v284 = vld [vmem:[#allocation6 + $0x218] sm:$0xff]
        %v285 = vld [vmem:[#allocation6 + $0x220] sm:$0xff]
        %v286 = vld [vmem:[#allocation6 + $0x228] sm:$0xff]
        %v287 = vld [vmem:[#allocation6 + $0x230] sm:$0xff]
        %v288 = vld [vmem:[#allocation6 + $0x238] sm:$0xff]
        %v289 = vld [vmem:[#allocation6 + $0x240] sm:$0xff]
        %v290 = vld [vmem:[#allocation6 + $0x248] sm:$0xff]
        %v291 = vld [vmem:[#allocation6 + $0x250] sm:$0xff]
        %v292 = vld [vmem:[#allocation6 + $0x258] sm:$0xff]
        %v293 = vld [vmem:[#allocation6 + $0x260] sm:$0xff]
        %v294 = vld [vmem:[#allocation6 + $0x268] sm:$0xff]
        %v295 = vld [vmem:[#allocation6 + $0x270] sm:$0xff]
        %v296 = vld [vmem:[#allocation6 + $0x278] sm:$0xff]
        %v297 = vld [vmem:[#allocation6 + $0x280] sm:$0xff]
        %v298 = vld [vmem:[#allocation6 + $0x288] sm:$0xff]
        %v299 = vld [vmem:[#allocation6 + $0x290] sm:$0xff]
        %v300 = vld [vmem:[#allocation6 + $0x298] sm:$0xff]
        %v301 = vld [vmem:[#allocation6 + $0x2a0] sm:$0xff]
        %v302 = vld [vmem:[#allocation6 + $0x2a8] sm:$0xff]
        %v303 = vld [vmem:[#allocation6 + $0x2b0] sm:$0xff]
        %v304 = vld [vmem:[#allocation6 + $0x2b8] sm:$0xff]
        %v305 = vld [vmem:[#allocation6 + $0x2c0] sm:$0xff]
        %v306 = vld [vmem:[#allocation6 + $0x2c8] sm:$0xff]
        %v307 = vld [vmem:[#allocation6 + $0x2d0] sm:$0xff]
        %v308 = vld [vmem:[#allocation6 + $0x2d8] sm:$0xff]
        %v309 = vld [vmem:[#allocation6 + $0x2e0] sm:$0xff]
        %v310 = vld [vmem:[#allocation6 + $0x2e8] sm:$0xff]
        %v311 = vld [vmem:[#allocation6 + $0x2f0] sm:$0xff]
        %v312 = vld [vmem:[#allocation6 + $0x2f8] sm:$0xff]
        %v313 = vld [vmem:[#allocation6 + $0x300] sm:$0xff]
        %v314 = vld [vmem:[#allocation6 + $0x308] sm:$0xff]
        %v315 = vld [vmem:[#allocation6 + $0x310] sm:$0xff]
        %v316 = vld [vmem:[#allocation6 + $0x318] sm:$0xff]
        %v317 = vld [vmem:[#allocation6 + $0x320] sm:$0xff]
        %v318 = vld [vmem:[#allocation6 + $0x328] sm:$0xff]
        %v319 = vld [vmem:[#allocation6 + $0x330] sm:$0xff]
        %v320 = vld [vmem:[#allocation6 + $0x338] sm:$0xff]
        %v321 = vld [vmem:[#allocation6 + $0x340] sm:$0xff]
        %v322 = vld [vmem:[#allocation6 + $0x348] sm:$0xff]
        %v323 = vld [vmem:[#allocation6 + $0x350] sm:$0xff]
        %v324 = vld [vmem:[#allocation6 + $0x358] sm:$0xff]
        %v325 = vld [vmem:[#allocation6 + $0x360] sm:$0xff]
        %v326 = vld [vmem:[#allocation6 + $0x368] sm:$0xff]
        %v327 = vld [vmem:[#allocation6 + $0x370] sm:$0xff]
        %v328 = vld [vmem:[#allocation6 + $0x378] sm:$0xff]
        %v329 = vld [vmem:[#allocation6 + $0x380] sm:$0xff]
        %v330 = vld [vmem:[#allocation6 + $0x388] sm:$0xff]
        %v331 = vld [vmem:[#allocation6 + $0x390] sm:$0xff]
        %v332 = vld [vmem:[#allocation6 + $0x398] sm:$0xff]
        %v333 = vld [vmem:[#allocation6 + $0x3a0] sm:$0xff]
        %v334 = vld [vmem:[#allocation6 + $0x3a8] sm:$0xff]
        %v335 = vld [vmem:[#allocation6 + $0x3b0] sm:$0xff]
        %v336 = vld [vmem:[#allocation6 + $0x3b8] sm:$0xff]
        %v337 = vld [vmem:[#allocation6 + $0x3c0] sm:$0xff]
        %v338 = vld [vmem:[#allocation6 + $0x3c8] sm:$0xff]
        %v339 = vld [vmem:[#allocation6 + $0x3d0] sm:$0xff]
        %v340 = vld [vmem:[#allocation6 + $0x3d8] sm:$0xff]
        %v341 = vld [vmem:[#allocation6 + $0x3e0] sm:$0xff]
        %v342 = vld [vmem:[#allocation6 + $0x3e8] sm:$0xff]
        %v343 = vld [vmem:[#allocation6 + $0x3f0] sm:$0xff]
        %v344 = vld [vmem:[#allocation6 + $0x3f8] sm:$0xff]
        %v345 = vld [vmem:[#allocation6 + $0x400] sm:$0xff]
        %v346 = vld [vmem:[#allocation6 + $0x408] sm:$0xff]
        %v347 = vld [vmem:[#allocation6 + $0x410] sm:$0xff]
        %v348 = vld [vmem:[#allocation6 + $0x418] sm:$0xff]
        %v349 = vld [vmem:[#allocation6 + $0x420] sm:$0xff]
        %v350 = vld [vmem:[#allocation6 + $0x428] sm:$0xff]
        %v351 = vld [vmem:[#allocation6 + $0x430] sm:$0xff]
        %v352 = vld [vmem:[#allocation6 + $0x438] sm:$0xff]
        %v353 = vld [vmem:[#allocation6 + $0x440] sm:$0xff]
        %v354 = vld [vmem:[#allocation6 + $0x448] sm:$0xff]
        %v355 = vld [vmem:[#allocation6 + $0x450] sm:$0xff]
        %v356 = vld [vmem:[#allocation6 + $0x458] sm:$0xff]
        %v357 = vld [vmem:[#allocation6 + $0x460] sm:$0xff]
        %v358 = vld [vmem:[#allocation6 + $0x468] sm:$0xff]
        %v359 = vld [vmem:[#allocation6 + $0x470] sm:$0xff]
        %v360 = vld [vmem:[#allocation6 + $0x478] sm:$0xff]
        %v361 = vld [vmem:[#allocation6 + $0x480] sm:$0xff]
        %v362 = vld [vmem:[#allocation6 + $0x488] sm:$0xff]
        %v363 = vld [vmem:[#allocation6 + $0x490] sm:$0xff]
        %v364 = vld [vmem:[#allocation6 + $0x498] sm:$0xff]
        %v365 = vld [vmem:[#allocation6 + $0x4a0] sm:$0xff]
        %v366 = vld [vmem:[#allocation6 + $0x4a8] sm:$0xff]
        %v367 = vld [vmem:[#allocation6 + $0x4b0] sm:$0xff]
        %v368 = vld [vmem:[#allocation6 + $0x4b8] sm:$0xff]
        %v369 = vld [vmem:[#allocation6 + $0x4c0] sm:$0xff]
        %v370 = vld [vmem:[#allocation6 + $0x4c8] sm:$0xff]
        %v371 = vld [vmem:[#allocation6 + $0x4d0] sm:$0xff]
        %v372 = vld [vmem:[#allocation6 + $0x4d8] sm:$0xff]
        %v373 = vld [vmem:[#allocation6 + $0x4e0] sm:$0xff]
        %v374 = vld [vmem:[#allocation6 + $0x4e8] sm:$0xff]
        %v375 = vld [vmem:[#allocation6 + $0x4f0] sm:$0xff]
        %v376 = vld [vmem:[#allocation6 + $0x4f8] sm:$0xff]
        %s377 = sld [smem:[#allocation2]]
        %v378 = vstv %s377
        %379 = vmatpush.msra.mxu0 %v232
        %380 = vmatpush.msra.mxu0 %v231
        %381 = vmatpush.msra.mxu0 %v230
        %382 = vmatpush.msra.mxu0 %v229
        %383 = vmatpush.msra.mxu0 %v228
        %384 = vmatpush.msra.mxu0 %v227
        %385 = vmatpush.msra.mxu0 %v226
        %386 = vmatpush.msra.mxu0 %v225
        %387 = vmatpush.msra.mxu0 %v224
        %388 = vmatpush.msra.mxu0 %v223
        %389 = vmatpush.msra.mxu0 %v222
        %390 = vmatpush.msra.mxu0 %v221
        %391 = vmatpush.msra.mxu0 %v220
        %392 = vmatpush.msra.mxu0 %v219
        %393 = vmatpush.msra.mxu0 %v218
        %394 = vmatpush.msra.mxu0 %v217
        %395 = vmatmul.f32.gmra.mxu0 %v207
        %v396 = vpop.f32.mrf.mxu0
        %v397 = vadd.f32 %v378, %v396
        %398 = vdwg.mxu0
        %399 = vmatpush.msra.mxu0 %v248
        %400 = vmatpush.msra.mxu0 %v247
        %401 = vmatpush.msra.mxu0 %v246
        %402 = vmatpush.msra.mxu0 %v245
        %403 = vmatpush.msra.mxu0 %v244
        %404 = vmatpush.msra.mxu0 %v243
        %405 = vmatpush.msra.mxu0 %v242
        %406 = vmatpush.msra.mxu0 %v241
        %407 = vmatpush.msra.mxu0 %v240
        %408 = vmatpush.msra.mxu0 %v239
        %409 = vmatpush.msra.mxu0 %v238
        %410 = vmatpush.msra.mxu0 %v237
        %411 = vmatpush.msra.mxu0 %v236
        %412 = vmatpush.msra.mxu0 %v235
        %413 = vmatpush.msra.mxu0 %v234
        %414 = vmatpush.msra.mxu0 %v233
        %415 = vmatmul.f32.gmra.mxu0 %v208
        %v416 = vpop.f32.mrf.mxu0
        %v417 = vadd.f32 %v397, %v416
        %418 = vdwg.mxu0
        %419 = vmatpush.msra.mxu0 %v264
        %420 = vmatpush.msra.mxu0 %v263
        %421 = vmatpush.msra.mxu0 %v262
        %422 = vmatpush.msra.mxu0 %v261
        %423 = vmatpush.msra.mxu0 %v260
        %424 = vmatpush.msra.mxu0 %v259
        %425 = vmatpush.msra.mxu0 %v258
        %426 = vmatpush.msra.mxu0 %v257
        %427 = vmatpush.msra.mxu0 %v256
        %428 = vmatpush.msra.mxu0 %v255
        %429 = vmatpush.msra.mxu0 %v254
        %430 = vmatpush.msra.mxu0 %v253
        %431 = vmatpush.msra.mxu0 %v252
        %432 = vmatpush.msra.mxu0 %v251
        %433 = vmatpush.msra.mxu0 %v250
        %434 = vmatpush.msra.mxu0 %v249
        %435 = vmatmul.f32.gmra.mxu0 %v209
        %v436 = vpop.f32.mrf.mxu0
        %v437 = vadd.f32 %v417, %v436
        %438 = vdwg.mxu0
        %439 = vmatpush.msra.mxu0 %v280
        %440 = vmatpush.msra.mxu0 %v279
        %441 = vmatpush.msra.mxu0 %v278
        %442 = vmatpush.msra.mxu0 %v277
        %443 = vmatpush.msra.mxu0 %v276
        %444 = vmatpush.msra.mxu0 %v275
        %445 = vmatpush.msra.mxu0 %v274
        %446 = vmatpush.msra.mxu0 %v273
        %447 = vmatpush.msra.mxu0 %v272
        %448 = vmatpush.msra.mxu0 %v271
        %449 = vmatpush.msra.mxu0 %v270
        %450 = vmatpush.msra.mxu0 %v269
        %451 = vmatpush.msra.mxu0 %v268
        %452 = vmatpush.msra.mxu0 %v267
        %453 = vmatpush.msra.mxu0 %v266
        %454 = vmatpush.msra.mxu0 %v265
        %455 = vmatmul.f32.gmra.mxu0 %v210
        %v456 = vpop.f32.mrf.mxu0
        %v457 = vadd.f32 %v437, %v456
        %458 = vdwg.mxu0
        %459 = vmatpush.msra.mxu0 %v296
        %460 = vmatpush.msra.mxu0 %v295
        %461 = vmatpush.msra.mxu0 %v294
        %462 = vmatpush.msra.mxu0 %v293
        %463 = vmatpush.msra.mxu0 %v292
        %464 = vmatpush.msra.mxu0 %v291
        %465 = vmatpush.msra.mxu0 %v290
        %466 = vmatpush.msra.mxu0 %v289
        %467 = vmatpush.msra.mxu0 %v288
        %468 = vmatpush.msra.mxu0 %v287
        %469 = vmatpush.msra.mxu0 %v286
        %470 = vmatpush.msra.mxu0 %v285
        %471 = vmatpush.msra.mxu0 %v284
        %472 = vmatpush.msra.mxu0 %v283
        %473 = vmatpush.msra.mxu0 %v282
        %474 = vmatpush.msra.mxu0 %v281
        %475 = vmatmul.f32.gmra.mxu0 %v211
        %v476 = vpop.f32.mrf.mxu0
        %v477 = vadd.f32 %v457, %v476
        %478 = vdwg.mxu0
        %479 = vmatpush.msra.mxu0 %v312
        %480 = vmatpush.msra.mxu0 %v311
        %481 = vmatpush.msra.mxu0 %v310
        %482 = vmatpush.msra.mxu0 %v309
        %483 = vmatpush.msra.mxu0 %v308
        %484 = vmatpush.msra.mxu0 %v307
        %485 = vmatpush.msra.mxu0 %v306
        %486 = vmatpush.msra.mxu0 %v305
        %487 = vmatpush.msra.mxu0 %v304
        %488 = vmatpush.msra.mxu0 %v303
        %489 = vmatpush.msra.mxu0 %v302
        %490 = vmatpush.msra.mxu0 %v301
        %491 = vmatpush.msra.mxu0 %v300
        %492 = vmatpush.msra.mxu0 %v299
        %493 = vmatpush.msra.mxu0 %v298
        %494 = vmatpush.msra.mxu0 %v297
        %495 = vmatmul.f32.gmra.mxu0 %v212
        %v496 = vpop.f32.mrf.mxu0
        %v497 = vadd.f32 %v477, %v496
        %498 = vdwg.mxu0
        %499 = vmatpush.msra.mxu0 %v328
        %500 = vmatpush.msra.mxu0 %v327
        %501 = vmatpush.msra.mxu0 %v326
        %502 = vmatpush.msra.mxu0 %v325
        %503 = vmatpush.msra.mxu0 %v324
        %504 = vmatpush.msra.mxu0 %v323
        %505 = vmatpush.msra.mxu0 %v322
        %506 = vmatpush.msra.mxu0 %v321
        %507 = vmatpush.msra.mxu0 %v320
        %508 = vmatpush.msra.mxu0 %v319
        %509 = vmatpush.msra.mxu0 %v318
        %510 = vmatpush.msra.mxu0 %v317
        %511 = vmatpush.msra.mxu0 %v316
        %512 = vmatpush.msra.mxu0 %v315
        %513 = vmatpush.msra.mxu0 %v314
        %514 = vmatpush.msra.mxu0 %v313
        %515 = vmatmul.f32.gmra.mxu0 %v213
        %v516 = vpop.f32.mrf.mxu0
        %v517 = vadd.f32 %v497, %v516
        %518 = vdwg.mxu0
        %519 = vmatpush.msra.mxu0 %v344
        %520 = vmatpush.msra.mxu0 %v343
        %521 = vmatpush.msra.mxu0 %v342
        %522 = vmatpush.msra.mxu0 %v341
        %523 = vmatpush.msra.mxu0 %v340
        %524 = vmatpush.msra.mxu0 %v339
        %525 = vmatpush.msra.mxu0 %v338
        %526 = vmatpush.msra.mxu0 %v337
        %527 = vmatpush.msra.mxu0 %v336
        %528 = vmatpush.msra.mxu0 %v335
        %529 = vmatpush.msra.mxu0 %v334
        %530 = vmatpush.msra.mxu0 %v333
        %531 = vmatpush.msra.mxu0 %v332
        %532 = vmatpush.msra.mxu0 %v331
        %533 = vmatpush.msra.mxu0 %v330
        %534 = vmatpush.msra.mxu0 %v329
        %535 = vmatmul.f32.gmra.mxu0 %v214
        %v536 = vpop.f32.mrf.mxu0
        %v537 = vadd.f32 %v517, %v536
        %538 = vdwg.mxu0
        %539 = vmatpush.msra.mxu0 %v360
        %540 = vmatpush.msra.mxu0 %v359
        %541 = vmatpush.msra.mxu0 %v358
        %542 = vmatpush.msra.mxu0 %v357
        %543 = vmatpush.msra.mxu0 %v356
        %544 = vmatpush.msra.mxu0 %v355
        %545 = vmatpush.msra.mxu0 %v354
        %546 = vmatpush.msra.mxu0 %v353
        %547 = vmatpush.msra.mxu0 %v352
        %548 = vmatpush.msra.mxu0 %v351
        %549 = vmatpush.msra.mxu0 %v350
        %550 = vmatpush.msra.mxu0 %v349
        %551 = vmatpush.msra.mxu0 %v348
        %552 = vmatpush.msra.mxu0 %v347
        %553 = vmatpush.msra.mxu0 %v346
        %554 = vmatpush.msra.mxu0 %v345
        %555 = vmatmul.f32.gmra.mxu0 %v215
        %v556 = vpop.f32.mrf.mxu0
        %v557 = vadd.f32 %v537, %v556
        %558 = vdwg.mxu0
        %559 = vmatpush.msra.mxu0 %v376
        %560 = vmatpush.msra.mxu0 %v375
        %561 = vmatpush.msra.mxu0 %v374
        %562 = vmatpush.msra.mxu0 %v373
        %563 = vmatpush.msra.mxu0 %v372
        %564 = vmatpush.msra.mxu0 %v371
        %565 = vmatpush.msra.mxu0 %v370
        %566 = vmatpush.msra.mxu0 %v369
        %567 = vmatpush.msra.mxu0 %v368
        %568 = vmatpush.msra.mxu0 %v367
        %569 = vmatpush.msra.mxu0 %v366
        %570 = vmatpush.msra.mxu0 %v365
        %571 = vmatpush.msra.mxu0 %v364
        %572 = vmatpush.msra.mxu0 %v363
        %573 = vmatpush.msra.mxu0 %v362
        %574 = vmatpush.msra.mxu0 %v361
        %575 = vmatmul.f32.gmra.mxu0 %v216
        %v576 = vpop.f32.mrf.mxu0
        %v577 = vadd.f32 %v557, %v576
        %578 = vdwg.mxu0
        %v579 = vxor.u32 %v577, 2147483648
        %v580 = vmul.f32 %v579, 1.442695
        %v581 = vpow.pop %v580
        %v582 = vadd.f32 %v581, 1.0
        %v583 = vrcp.pop %v582
        %v584 = vmul.f32 %v582, %v583
        %v585 = vsub.f32 1.0, %v584
        %v586 = vmul.f32 %v583, %v585
        %v587 = vadd.f32 %v583, %v586
        %vm588 = vweird.f32 %v582
        %vm589 = vweird.f32 %v583
        %vm590 = vmor %vm588, %vm589
        %v591 = vsel %vm590, %v583, %v587
        %v592 = vand.u32 2147483647, %v582
        %vm593 = vcmp.eq.f32.partialorder %v592, 8.507059e+37
        %v594 = vand.u32 %v582, 2147483648
        %v595 = vor.u32 1.1754944e-38, %v594
        %v596 = vsel %vm593, %v595, %v591
        %v597 = vmul.f32 1.0, %v596
        %598 = vst [vmem:[%s206] sm:$0xff] %v597
        %s599 = sand.u32 %s98, 1
        %s600 = scalar_lea.sflag [#allocation5], %s599
        %s601 = sand.u32 %s98, 1
        %s602 = smul.addr %s601, 8
        %s603 = scalar_lea.vmem [#allocation8], %s602
        // Predicated region
        $region41: #{tpu_custom_call.1} parent=31 // pred_check
          %p604 = pneg %p108
        $region42: #{tpu_custom_call.1} parent=31 // pred_check_branch
          %606 = sbr.rel (%p604) target = $region44
        $region43: #{tpu_custom_call.1} parent=31 // pred_region
          %608 = vsyncadd %s600, 0
          %s609 = smul.addr %s22, 8
          %s610 = scalar_lea.hbm %s3, %s609
          %s612 = sshll.u32 %s603, 4
          %s613 = int_to_ptr.vmem [resolvable:$true] %s612
          %s614 = sshll.u32 %s610, 4
          %s615 = int_to_ptr.hbm [resolvable:$true] %s614
          %617 = dma.vmem_to_hbm [thread:$0]  %s613, 128, %s615, %s600
        $region44: #{tpu_custom_call.1} parent=31 // pred_fallthru
          _
      $region32: #{tpu_custom_call.1} parent=5 // pred_fallthru
        _
      %p618 = scmp.le.s32.totalorder 2, %s17
      // Predicated region
      $region45: #{tpu_custom_call.1} parent=5 // pred_check
        %p619 = pneg %p618
      $region46: #{tpu_custom_call.1} parent=5 // pred_check_branch
        %621 = sbr.rel (%p619) target = $region48
      $region47: #{tpu_custom_call.1} parent=5 // pred_region
        %s622 = ssub.s32 %s17, 2
        // Predicated region
        $region49: #{tpu_custom_call.1} parent=47 // pred_check
          %p623 = pneg %p114
        $region50: #{tpu_custom_call.1} parent=47 // pred_check_branch
          %625 = sbr.rel (%p623) target = $region52
        $region51: #{tpu_custom_call.1} parent=47 // pred_region
          %s626 = sand.u32 %s99, 1
          %s627 = scalar_lea.sflag [#allocation5], %s626
          %s628 = sand.u32 %s99, 1
          %s629 = smul.addr %s628, 8
          %s630 = scalar_lea.vmem [#allocation8], %s629
          %632 = dma.done %s627, 128
        $region52: #{tpu_custom_call.1} parent=47 // pred_fallthru
          _
      $region48: #{tpu_custom_call.1} parent=5 // pred_fallthru
        _
    $region6: #{tpu_custom_call.1} parent=1 // loop_footer
      %s21 = sadd.s32 1, %s17
    $region7: #{tpu_custom_call.1} parent=1 // loop_footer_branch
      %16 = sbr.rel target = $region3
    $region8: #{tpu_custom_call.1} parent=1 // loop_exit
      _
    %633 = vsyncpa [#allocation4], 1
    %s634 = scalar_lea.sflag [#allocation4], 1
    %635 = vsyncpa %s634, 1
    %636 = vsyncpa [#allocation7], 1
    %637 = vsyncpa [#allocation5], 1
    %s638 = scalar_lea.sflag [#allocation5], 1
    %639 = vsyncpa %s638, 1

</llo_original>
